<compile_context>
chip_gen: v6e
topology: v6e:2x2x1
jax: 0.10.0
libtpu: 0.0.40
codegen_flags: <defaults>
</compile_context>

<pallas_src>
from functools import partial

import jax
import jax.numpy as jnp
from jax.experimental import pallas as pl
from jax.experimental.pallas import tpu as pltpu


def _gat_kernel(x_ref, adj_ref, w_ref, a_mat_ref, bias_ref, o_ref,
                xw_ref, dst_ref, src_t_ref, *,
                heads, out_channels, negative_slope, row_tile):
    H, C, TN = heads, out_channels, row_tile
    N = x_ref.shape[1]

    t = pl.program_id(1)
    # N % TN == 0 and (TN % 8 == 0 or TN == N), so t*TN is a multiple of 8
    # whenever t > 0 is possible.
    row0 = pl.multiple_of(t * TN, 8)

    # ---- once per graph (row-tile 0): projection + attention scores --------
    @pl.when(t == 0)
    def _():
        xw = jnp.dot(x_ref[0], w_ref[...],
                     preferred_element_type=jnp.float32)          # (N, H*C) f32
        # bf16 copy feeds the aggregation matmuls (f32 accumulation there).
        xw_ref[...] = xw.astype(jnp.bfloat16)
        # scores[:, h]   = <xw_h, att_src_h>  (alpha_src, per source node j)
        # scores[:, H+h] = <xw_h, att_dst_h>  (alpha_dst, per target node i)
        scores = jnp.dot(xw, a_mat_ref[...],
                         preferred_element_type=jnp.float32)      # (N, 2H)
        dst_ref[...] = scores[:, H:]                               # (N, H) node-major
        # Lane-major copy of alpha_src so each head is a ready (1, N) row.
        src_t_ref[...] = jnp.concatenate(
            [jnp.transpose(scores[:, h:h + 1]) for h in range(H)], axis=0)

    # ---- per row-tile -------------------------------------------------------
    adj = adj_ref[0]                                               # (TN, N)
    rows = row0 + jax.lax.broadcasted_iota(jnp.int32, (TN, N), 0)
    cols = jax.lax.broadcasted_iota(jnp.int32, (TN, N), 1)
    # add_self_loops=True: the diagonal is always an edge; mask after exp.
    edge_f = jnp.logical_or(adj != 0.0, rows == cols).astype(jnp.float32)

    dst_tile = dst_ref[pl.ds(row0, TN), :]                         # (TN, H) f32
    src_all = src_t_ref[...]                                       # (H, N) f32

    # H is small (<= ~4); static unroll keeps only a few (TN, N) temporaries
    # live per head.  (For large H switch to lax.fori_loop / a head grid axis.)
    head_outs = []
    for h in range(H):
        logits = dst_tile[:, h:h + 1] + src_all[h:h + 1, :]         # (TN, N)
        logits = jnp.where(logits > 0, logits, negative_slope * logits)
        m = jnp.max(logits, axis=1, keepdims=True)                  # (TN, 1)
        e = jnp.exp(logits - m) * edge_f                            # (TN, N)
        s = jnp.sum(e, axis=1, keepdims=True)                       # (TN, 1) > 0 (self-loop)
        # Aggregate un-normalized weights on the MXU (bf16 in, f32 acc), then
        # rescale the (TN, C) result -- no divide over the (TN, N) tile.
        agg = jnp.dot(e.astype(jnp.bfloat16), xw_ref[:, h * C:(h + 1) * C],
                      preferred_element_type=jnp.float32)           # (TN, C)
        head_outs.append(agg * pl.reciprocal(s, approx=True))
        # dropout p=0.0 -> no-op.

    out_tile = jnp.concatenate(head_outs, axis=-1)                  # (TN, H*C)
    o_ref[0] = out_tile + bias_ref[...]                             # one lane-dense store


# Conservative VMEM budget that works across v5e/v6e (128 MiB physical) and
# v7x (64 MiB physical).  On v5e/v6e this could be raised toward ~100 MiB to
# allow larger row tiles.
_VMEM_BUDGET = 48 * 2**20


def _vmem_bytes_estimate(tn, n, f, hc, h):
    io = 2 * 4 * (tn * n + tn * hc) + 2 * 4 * n * f       # double-buffered adj/out tiles + x
    params = 4 * (f * hc + hc * 2 * h + hc)
    scratch = 2 * n * hc + 4 * n * h + 4 * h * n          # xw (bf16) + dst + srcT
    temps = 6 * 4 * tn * n                                 # logits / e / mask / iotas
    return io + params + scratch + temps


def _choose_row_tile(n, f, hc, h, budget_bytes):
    # Candidates: multiples of 8 dividing N (plus N itself as full-dim fallback).
    cands = sorted({d for d in range(8, min(n, 1024) + 1, 8) if n % d == 0} | {n},
                   reverse=True)
    for tn in cands:
        if _vmem_bytes_estimate(tn, n, f, hc, h) <= budget_bytes:
            return tn
    return cands[-1]


def dense_gat_conv(x, adj, w, att_src, att_dst, bias, *, heads, out_channels,
                   negative_slope=0.2, row_tile=None):
    """DenseGATConv forward (concat=True, bias=True, add_self_loops=True,
    dropout=0, mask=None)."""
    B, N, F = x.shape
    H, C = heads, out_channels
    HC = H * C

    # Block-diagonal attention matrix: scores = xw @ a_mat gives, per head h,
    # column h = <xw_h, att_src_h> and column H+h = <xw_h, att_dst_h>.
    eye = jnp.eye(H, dtype=jnp.float32)
    a_src_blk = (att_src[:, :, None] * eye[:, None, :]).reshape(HC, H)
    a_dst_blk = (att_dst[:, :, None] * eye[:, None, :]).reshape(HC, H)
    a_mat = jnp.concatenate([a_src_blk, a_dst_blk], axis=1)        # (HC, 2H)

    bias2d = bias.reshape(1, HC).astype(jnp.float32)

    if row_tile is None:
        row_tile = _choose_row_tile(N, F, HC, H, _VMEM_BUDGET)
    TN = row_tile
    assert N % TN == 0 and (TN % 8 == 0 or TN == N), "invalid row tile"
    n_tiles = N // TN

    vmem_limit = int(min(max(2 * _vmem_bytes_estimate(TN, N, F, HC, H),
                             32 * 2**20), _VMEM_BUDGET))

    flops = 2 * B * (N * F * HC + N * HC * 2 * H + H * N * N * C) + 6 * B * H * N * N
    bytes_accessed = 4 * B * (N * F + N * N + N * HC) + 4 * (F * HC + HC * 2 * H + HC)
    cost = pl.CostEstimate(flops=flops,
                           transcendentals=B * H * N * N,
                           bytes_accessed=bytes_accessed)

    kernel = partial(_gat_kernel, heads=H, out_channels=C,
                     negative_slope=negative_slope, row_tile=TN)

    return pl.pallas_call(
        kernel,
        out_shape=jax.ShapeDtypeStruct((B, N, HC), jnp.float32),
        grid_spec=pltpu.PrefetchScalarGridSpec(
            num_scalar_prefetch=0,
            grid=(B, n_tiles),
            in_specs=[
                pl.BlockSpec((1, N, F), lambda b, t: (b, 0, 0)),    # x (full graph)
                pl.BlockSpec((1, TN, N), lambda b, t: (b, t, 0)),   # adj rows of this tile
                pl.BlockSpec((F, HC), lambda b, t: (0, 0)),         # lin weight
                pl.BlockSpec((HC, 2 * H), lambda b, t: (0, 0)),     # block-diag att matrix
                pl.BlockSpec((1, HC), lambda b, t: (0, 0)),         # bias
            ],
            out_specs=pl.BlockSpec((1, TN, HC), lambda b, t: (b, t, 0)),
            scratch_shapes=[
                pltpu.VMEM((N, HC), jnp.bfloat16),   # xw for the whole graph
                pltpu.VMEM((N, H), jnp.float32),     # alpha_dst per node
                pltpu.VMEM((H, N), jnp.float32),     # alpha_src, lane-major per head
            ],
        ),
        compiler_params=pltpu.CompilerParams(
            # Row-tile axis must stay "arbitrary": the VMEM scratch (xw and the
            # attention scores) is filled at t == 0 and reused by later tiles
            # of the same graph; batch is the megacore-parallel axis.
            dimension_semantics=("parallel", "arbitrary"),
            vmem_limit_bytes=vmem_limit),
        cost_estimate=cost,
    )(x, adj, w, a_mat, bias2d)
    # TODO(synk): optional `mask` (B, N) argument, dropout > 0, and the
    # concat=False (mean-over-heads) path are not implemented.


def _reference(x, adj, w, att_src, att_dst, bias, heads, C, neg_slope):
    """Pure-JAX reference mirroring the PyTorch forward exactly (f32)."""
    B, N, _ = x.shape
    idx = jnp.arange(N)
    adj = adj.at[:, idx, idx].set(1.0)
    xw = (x @ w).reshape(B, N, heads, C)
    a_src = jnp.sum(xw * att_src[None, None], axis=-1)          # (B, N, H)
    a_dst = jnp.sum(xw * att_dst[None, None], axis=-1)          # (B, N, H)
    alpha = a_src[:, None, :, :] + a_dst[:, :, None, :]         # (B, Ni, Nj, H)
    alpha = jnp.where(alpha > 0, alpha, neg_slope * alpha)
    alpha = jnp.where(adj[..., None] == 0, -jnp.inf, alpha)
    alpha = jax.nn.softmax(alpha, axis=2)
    out = jnp.einsum('bijh,bjhc->bihc', alpha, xw)
    return out.reshape(B, N, heads * C) + bias


if __name__ == "__main__":
    B, N, F = 2, 8, 16          # batch, nodes, in_channels
    H, C = 4, 8                 # heads, out_channels
    neg_slope = 0.2

    key = jax.random.PRNGKey(0)
    k_x, k_adj, k_w, k_as, k_ad = jax.random.split(key, 5)

    x = jax.random.normal(k_x, (B, N, F), dtype=jnp.float32)
    adj = (jax.random.uniform(k_adj, (B, N, N)) > 0.5).astype(jnp.float32)

    # glorot (uniform) init, matching the module's reset_parameters shapes.
    def glorot(k, shape, fan_in, fan_out):
        lim = jnp.sqrt(6.0 / (fan_in + fan_out))
        return jax.random.uniform(k, shape, jnp.float32, -lim, lim)

    w = glorot(k_w, (F, H * C), F, H * C)              # lin.weight (transposed)
    att_src = glorot(k_as, (H, C), H * C, 1)           # att_src (1,1,H,C) squeezed
    att_dst = glorot(k_ad, (H, C), H * C, 1)           # att_dst (1,1,H,C) squeezed
    bias = jnp.zeros((H * C,), dtype=jnp.float32)      # zeros(), concat=True

    out = dense_gat_conv(x, adj, w, att_src, att_dst, bias,
                         heads=H, out_channels=C, negative_slope=neg_slope)
    out = jax.block_until_ready(out)

    ref = _reference(x, adj, w, att_src, att_dst, bias, H, C, neg_slope)
    assert out.shape == (B, N, H * C)
    # bf16 MXU aggregation + approx reciprocal => relaxed tolerance vs f32 ref.
    max_err = jnp.max(jnp.abs(out - ref))
    assert jnp.allclose(out, ref, atol=2e-2, rtol=2e-2), (
        f"mismatch vs reference (max abs err {max_err})")

    print("KERNEL_OK")
</pallas_src>

<mosaic_0001>
module attributes {stable_mosaic.version = 11 : i64} {
  func.func @_gat_kernel(%arg0: i32, %arg1: i32, %arg2: memref<1x8x16xf32, #tpu.memory_space<vmem>>, %arg3: memref<1x8x8xf32, #tpu.memory_space<vmem>>, %arg4: memref<16x32xf32, #tpu.memory_space<vmem>>, %arg5: memref<32x8xf32, #tpu.memory_space<vmem>>, %arg6: memref<1x32xf32, #tpu.memory_space<vmem>>, %arg7: memref<1x8x32xf32, #tpu.memory_space<vmem>>, %arg8: memref<8x32xbf16, #tpu.memory_space<vmem>>, %arg9: memref<8x4xf32, #tpu.memory_space<vmem>>, %arg10: memref<4x8xf32, #tpu.memory_space<vmem>>) attributes {dimension_semantics = [#tpu.dimension_semantics<parallel>, #tpu.dimension_semantics<arbitrary>], iteration_bounds = array<i64: 2, 1>, scalar_prefetch = 0 : i64, scratch_operands = 3 : i64, tpu.core_type = #tpu.core_type<tc>, window_params = [{transform_indices = @transform_0, window_bounds = array<i64: 1, 8, 16>}, {transform_indices = @transform_1, window_bounds = array<i64: 1, 8, 8>}, {pipeline_mode = #tpu.pipeline_mode<synchronous>, transform_indices = @transform_2, window_bounds = array<i64: 16, 32>}, {pipeline_mode = #tpu.pipeline_mode<synchronous>, transform_indices = @transform_3, window_bounds = array<i64: 32, 8>}, {pipeline_mode = #tpu.pipeline_mode<synchronous>, transform_indices = @transform_4, window_bounds = array<i64: 1, 32>}, {transform_indices = @transform_5, window_bounds = array<i64: 1, 8, 32>}]} {
    %c8_i32 = arith.constant 8 : i32
    %0 = arith.muli %arg1, %c8_i32 : i32
    %1 = tpu.assume_multiple %0, 8 : i32
    %c0_i32 = arith.constant 0 : i32
    %2 = arith.cmpi eq, %arg1, %c0_i32 : i32
    %3 = arith.extui %2 : i1 to i32
    %c0_i32_0 = arith.constant 0 : i32
    %4 = arith.cmpi ne, %3, %c0_i32_0 : i32
    scf.if %4 {
      %c0_36 = arith.constant 0 : index
      %c0_37 = arith.constant 0 : index
      %c0_38 = arith.constant 0 : index
      %123 = vector.load %arg2[%c0_36, %c0_37, %c0_38] : memref<1x8x16xf32, #tpu.memory_space<vmem>>, vector<1x8x16xf32>
      %124 = vector.shape_cast %123 : vector<1x8x16xf32> to vector<8x16xf32>
      %c0_39 = arith.constant 0 : index
      %c0_40 = arith.constant 0 : index
      %125 = vector.load %arg4[%c0_39, %c0_40] : memref<16x32xf32, #tpu.memory_space<vmem>>, vector<16x32xf32>
      %cst_41 = arith.constant dense<0.000000e+00> : vector<8x32xf32>
      %126 = tpu.matmul %124, %125, %cst_41 {dimension_numbers = #tpu.dot_dimension_numbers<[1], [0], [0], [1], [0, 0, 1, 1], [], []>} : vector<8x16xf32>, vector<16x32xf32>, vector<8x32xf32> -> vector<8x32xf32>
      %127 = arith.truncf %126 : vector<8x32xf32> to vector<8x32xbf16>
      %c0_42 = arith.constant 0 : index
      %c0_43 = arith.constant 0 : index
      %128 = vector.load %arg8[%c0_42, %c0_43] : memref<8x32xbf16, #tpu.memory_space<vmem>>, vector<8x32xbf16>
      tpu.vector_store %arg8[%c0_42, %c0_43], %127 {strides = array<i32>} : memref<8x32xbf16, #tpu.memory_space<vmem>>, vector<8x32xbf16>,
      %c0_44 = arith.constant 0 : index
      %c0_45 = arith.constant 0 : index
      %129 = vector.load %arg5[%c0_44, %c0_45] : memref<32x8xf32, #tpu.memory_space<vmem>>, vector<32x8xf32>
      %cst_46 = arith.constant dense<0.000000e+00> : vector<8x8xf32>
      %130 = tpu.matmul %126, %129, %cst_46 {dimension_numbers = #tpu.dot_dimension_numbers<[1], [0], [0], [1], [0, 0, 1, 1], [], []>} : vector<8x32xf32>, vector<32x8xf32>, vector<8x8xf32> -> vector<8x8xf32>
      %131 = vector.extract_strided_slice %130 {offsets = [0, 4], sizes = [8, 4], strides = [1, 1]} : vector<8x8xf32> to vector<8x4xf32>
      %c0_47 = arith.constant 0 : index
      %c0_48 = arith.constant 0 : index
      %132 = vector.load %arg9[%c0_47, %c0_48] : memref<8x4xf32, #tpu.memory_space<vmem>>, vector<8x4xf32>
      tpu.vector_store %arg9[%c0_47, %c0_48], %131 {strides = array<i32>} : memref<8x4xf32, #tpu.memory_space<vmem>>, vector<8x4xf32>,
      %133 = vector.extract_strided_slice %130 {offsets = [0, 0], sizes = [8, 1], strides = [1, 1]} : vector<8x8xf32> to vector<8x1xf32>
      %134 = tpu.transpose %133, [1, 0] : vector<8x1xf32> -> vector<1x8xf32>
      %135 = vector.extract_strided_slice %130 {offsets = [0, 1], sizes = [8, 1], strides = [1, 1]} : vector<8x8xf32> to vector<8x1xf32>
      %136 = tpu.transpose %135, [1, 0] : vector<8x1xf32> -> vector<1x8xf32>
      %137 = vector.extract_strided_slice %130 {offsets = [0, 2], sizes = [8, 1], strides = [1, 1]} : vector<8x8xf32> to vector<8x1xf32>
      %138 = tpu.transpose %137, [1, 0] : vector<8x1xf32> -> vector<1x8xf32>
      %139 = vector.extract_strided_slice %130 {offsets = [0, 3], sizes = [8, 1], strides = [1, 1]} : vector<8x8xf32> to vector<8x1xf32>
      %140 = tpu.transpose %139, [1, 0] : vector<8x1xf32> -> vector<1x8xf32>
      %141 = tpu.concatenate %134, %136, %138, %140 in 0 : vector<1x8xf32>, vector<1x8xf32>, vector<1x8xf32>, vector<1x8xf32> -> vector<4x8xf32>
      %c0_49 = arith.constant 0 : index
      %c0_50 = arith.constant 0 : index
      %142 = vector.load %arg10[%c0_49, %c0_50] : memref<4x8xf32, #tpu.memory_space<vmem>>, vector<4x8xf32>
      tpu.vector_store %arg10[%c0_49, %c0_50], %141 {strides = array<i32>} : memref<4x8xf32, #tpu.memory_space<vmem>>, vector<4x8xf32>,
    } else {
    }
    %c0 = arith.constant 0 : index
    %c0_1 = arith.constant 0 : index
    %c0_2 = arith.constant 0 : index
    %5 = vector.load %arg3[%c0, %c0_1, %c0_2] : memref<1x8x8xf32, #tpu.memory_space<vmem>>, vector<1x8x8xf32>
    %6 = vector.shape_cast %5 : vector<1x8x8xf32> to vector<8x8xf32>
    %7 = tpu.iota {dimensions = array<i32: 0>} : vector<8x8xi32>
    %8 = vector.broadcast %1 : i32 to vector<8x8xi32>
    %9 = arith.addi %8, %7 : vector<8x8xi32>
    %10 = tpu.iota {dimensions = array<i32: 1>} : vector<8x8xi32>
    %cst = arith.constant 0.000000e+00 : f32
    %11 = vector.broadcast %cst : f32 to vector<8x8xf32>
    %12 = arith.cmpf one, %6, %11 : vector<8x8xf32>
    %13 = arith.cmpi eq, %9, %10 : vector<8x8xi32>
    %14 = arith.ori %12, %13 : vector<8x8xi1>
    %15 = arith.extui %14 : vector<8x8xi1> to vector<8x8xi32>
    %16 = arith.sitofp %15 : vector<8x8xi32> to vector<8x8xf32>
    %17 = arith.index_cast %1 : i32 to index
    %c0_3 = arith.constant 0 : index
    %18 = vector.load %arg9[%17, %c0_3] : memref<8x4xf32, #tpu.memory_space<vmem>>, vector<8x4xf32>
    %c0_4 = arith.constant 0 : index
    %c0_5 = arith.constant 0 : index
    %19 = vector.load %arg10[%c0_4, %c0_5] : memref<4x8xf32, #tpu.memory_space<vmem>>, vector<4x8xf32>
    %20 = vector.extract_strided_slice %18 {offsets = [0, 0], sizes = [8, 1], strides = [1, 1]} : vector<8x4xf32> to vector<8x1xf32>
    %21 = vector.extract_strided_slice %19 {offsets = [0, 0], sizes = [1, 8], strides = [1, 1]} : vector<4x8xf32> to vector<1x8xf32>
    %22 = vector.broadcast %20 : vector<8x1xf32> to vector<8x8xf32>
    %23 = vector.broadcast %21 : vector<1x8xf32> to vector<8x8xf32>
    %24 = arith.addf %22, %23 : vector<8x8xf32>
    %cst_6 = arith.constant 0.000000e+00 : f32
    %25 = vector.broadcast %cst_6 : f32 to vector<8x8xf32>
    %26 = arith.cmpf ogt, %24, %25 : vector<8x8xf32>
    %cst_7 = arith.constant 2.000000e-01 : f32
    %27 = vector.broadcast %cst_7 : f32 to vector<8x8xf32>
    %28 = arith.mulf %27, %24 : vector<8x8xf32>
    %29 = arith.select %26, %24, %28 : vector<8x8xi1>, vector<8x8xf32>
    %cst_8 = arith.constant dense<0xFF800000> : vector<8xf32>
    %30 = vector.multi_reduction <maximumf>, %29, %cst_8 [1] : vector<8x8xf32> to vector<8xf32>
    %31 = vector.shape_cast %30 : vector<8xf32> to vector<8x1xf32>
    %32 = vector.broadcast %31 : vector<8x1xf32> to vector<8x8xf32>
    %33 = arith.subf %29, %32 : vector<8x8xf32>
    %34 = math.exp %33 : vector<8x8xf32>
    %35 = arith.mulf %34, %16 : vector<8x8xf32>
    %cst_9 = arith.constant dense<0.000000e+00> : vector<8xf32>
    %36 = vector.multi_reduction <add>, %35, %cst_9 [1] : vector<8x8xf32> to vector<8xf32>
    %37 = vector.shape_cast %36 : vector<8xf32> to vector<8x1xf32>
    %38 = arith.truncf %35 : vector<8x8xf32> to vector<8x8xbf16>
    %c0_10 = arith.constant 0 : index
    %c0_11 = arith.constant 0 : index
    %39 = vector.load %arg8[%c0_10, %c0_11] : memref<8x32xbf16, #tpu.memory_space<vmem>>, vector<8x8xbf16>
    %cst_12 = arith.constant dense<0.000000e+00> : vector<8x8xf32>
    %40 = tpu.matmul %38, %39, %cst_12 {dimension_numbers = #tpu.dot_dimension_numbers<[1], [0], [0], [1], [0, 0, 1, 1], [], []>} : vector<8x8xbf16>, vector<8x8xbf16>, vector<8x8xf32> -> vector<8x8xf32>
    %41 = tpu.reciprocal %37 {approx = true} : vector<8x1xf32> -> vector<8x1xf32>
    %42 = vector.broadcast %41 : vector<8x1xf32> to vector<8x8xf32>
    %43 = arith.mulf %40, %42 : vector<8x8xf32>
    %44 = vector.extract_strided_slice %18 {offsets = [0, 1], sizes = [8, 1], strides = [1, 1]} : vector<8x4xf32> to vector<8x1xf32>
    %45 = vector.extract_strided_slice %19 {offsets = [1, 0], sizes = [1, 8], strides = [1, 1]} : vector<4x8xf32> to vector<1x8xf32>
    %46 = vector.broadcast %44 : vector<8x1xf32> to vector<8x8xf32>
    %47 = vector.broadcast %45 : vector<1x8xf32> to vector<8x8xf32>
    %48 = arith.addf %46, %47 : vector<8x8xf32>
    %cst_13 = arith.constant 0.000000e+00 : f32
    %49 = vector.broadcast %cst_13 : f32 to vector<8x8xf32>
    %50 = arith.cmpf ogt, %48, %49 : vector<8x8xf32>
    %cst_14 = arith.constant 2.000000e-01 : f32
    %51 = vector.broadcast %cst_14 : f32 to vector<8x8xf32>
    %52 = arith.mulf %51, %48 : vector<8x8xf32>
    %53 = arith.select %50, %48, %52 : vector<8x8xi1>, vector<8x8xf32>
    %cst_15 = arith.constant dense<0xFF800000> : vector<8xf32>
    %54 = vector.multi_reduction <maximumf>, %53, %cst_15 [1] : vector<8x8xf32> to vector<8xf32>
    %55 = vector.shape_cast %54 : vector<8xf32> to vector<8x1xf32>
    %56 = vector.broadcast %55 : vector<8x1xf32> to vector<8x8xf32>
    %57 = arith.subf %53, %56 : vector<8x8xf32>
    %58 = math.exp %57 : vector<8x8xf32>
    %59 = arith.mulf %58, %16 : vector<8x8xf32>
    %cst_16 = arith.constant dense<0.000000e+00> : vector<8xf32>
    %60 = vector.multi_reduction <add>, %59, %cst_16 [1] : vector<8x8xf32> to vector<8xf32>
    %61 = vector.shape_cast %60 : vector<8xf32> to vector<8x1xf32>
    %62 = arith.truncf %59 : vector<8x8xf32> to vector<8x8xbf16>
    %c0_17 = arith.constant 0 : index
    %c8 = arith.constant 8 : index
    %63 = vector.load %arg8[%c0_17, %c8] : memref<8x32xbf16, #tpu.memory_space<vmem>>, vector<8x8xbf16>
    %cst_18 = arith.constant dense<0.000000e+00> : vector<8x8xf32>
    %64 = tpu.matmul %62, %63, %cst_18 {dimension_numbers = #tpu.dot_dimension_numbers<[1], [0], [0], [1], [0, 0, 1, 1], [], []>} : vector<8x8xbf16>, vector<8x8xbf16>, vector<8x8xf32> -> vector<8x8xf32>
    %65 = tpu.reciprocal %61 {approx = true} : vector<8x1xf32> -> vector<8x1xf32>
    %66 = vector.broadcast %65 : vector<8x1xf32> to vector<8x8xf32>
    %67 = arith.mulf %64, %66 : vector<8x8xf32>
    %68 = vector.extract_strided_slice %18 {offsets = [0, 2], sizes = [8, 1], strides = [1, 1]} : vector<8x4xf32> to vector<8x1xf32>
    %69 = vector.extract_strided_slice %19 {offsets = [2, 0], sizes = [1, 8], strides = [1, 1]} : vector<4x8xf32> to vector<1x8xf32>
    %70 = vector.broadcast %68 : vector<8x1xf32> to vector<8x8xf32>
    %71 = vector.broadcast %69 : vector<1x8xf32> to vector<8x8xf32>
    %72 = arith.addf %70, %71 : vector<8x8xf32>
    %cst_19 = arith.constant 0.000000e+00 : f32
    %73 = vector.broadcast %cst_19 : f32 to vector<8x8xf32>
    %74 = arith.cmpf ogt, %72, %73 : vector<8x8xf32>
    %cst_20 = arith.constant 2.000000e-01 : f32
    %75 = vector.broadcast %cst_20 : f32 to vector<8x8xf32>
    %76 = arith.mulf %75, %72 : vector<8x8xf32>
    %77 = arith.select %74, %72, %76 : vector<8x8xi1>, vector<8x8xf32>
    %cst_21 = arith.constant dense<0xFF800000> : vector<8xf32>
    %78 = vector.multi_reduction <maximumf>, %77, %cst_21 [1] : vector<8x8xf32> to vector<8xf32>
    %79 = vector.shape_cast %78 : vector<8xf32> to vector<8x1xf32>
    %80 = vector.broadcast %79 : vector<8x1xf32> to vector<8x8xf32>
    %81 = arith.subf %77, %80 : vector<8x8xf32>
    %82 = math.exp %81 : vector<8x8xf32>
    %83 = arith.mulf %82, %16 : vector<8x8xf32>
    %cst_22 = arith.constant dense<0.000000e+00> : vector<8xf32>
    %84 = vector.multi_reduction <add>, %83, %cst_22 [1] : vector<8x8xf32> to vector<8xf32>
    %85 = vector.shape_cast %84 : vector<8xf32> to vector<8x1xf32>
    %86 = arith.truncf %83 : vector<8x8xf32> to vector<8x8xbf16>
    %c0_23 = arith.constant 0 : index
    %c16 = arith.constant 16 : index
    %87 = vector.load %arg8[%c0_23, %c16] : memref<8x32xbf16, #tpu.memory_space<vmem>>, vector<8x8xbf16>
    %cst_24 = arith.constant dense<0.000000e+00> : vector<8x8xf32>
    %88 = tpu.matmul %86, %87, %cst_24 {dimension_numbers = #tpu.dot_dimension_numbers<[1], [0], [0], [1], [0, 0, 1, 1], [], []>} : vector<8x8xbf16>, vector<8x8xbf16>, vector<8x8xf32> -> vector<8x8xf32>
    %89 = tpu.reciprocal %85 {approx = true} : vector<8x1xf32> -> vector<8x1xf32>
    %90 = vector.broadcast %89 : vector<8x1xf32> to vector<8x8xf32>
    %91 = arith.mulf %88, %90 : vector<8x8xf32>
    %92 = vector.extract_strided_slice %18 {offsets = [0, 3], sizes = [8, 1], strides = [1, 1]} : vector<8x4xf32> to vector<8x1xf32>
    %93 = vector.extract_strided_slice %19 {offsets = [3, 0], sizes = [1, 8], strides = [1, 1]} : vector<4x8xf32> to vector<1x8xf32>
    %94 = vector.broadcast %92 : vector<8x1xf32> to vector<8x8xf32>
    %95 = vector.broadcast %93 : vector<1x8xf32> to vector<8x8xf32>
    %96 = arith.addf %94, %95 : vector<8x8xf32>
    %cst_25 = arith.constant 0.000000e+00 : f32
    %97 = vector.broadcast %cst_25 : f32 to vector<8x8xf32>
    %98 = arith.cmpf ogt, %96, %97 : vector<8x8xf32>
    %cst_26 = arith.constant 2.000000e-01 : f32
    %99 = vector.broadcast %cst_26 : f32 to vector<8x8xf32>
    %100 = arith.mulf %99, %96 : vector<8x8xf32>
    %101 = arith.select %98, %96, %100 : vector<8x8xi1>, vector<8x8xf32>
    %cst_27 = arith.constant dense<0xFF800000> : vector<8xf32>
    %102 = vector.multi_reduction <maximumf>, %101, %cst_27 [1] : vector<8x8xf32> to vector<8xf32>
    %103 = vector.shape_cast %102 : vector<8xf32> to vector<8x1xf32>
    %104 = vector.broadcast %103 : vector<8x1xf32> to vector<8x8xf32>
    %105 = arith.subf %101, %104 : vector<8x8xf32>
    %106 = math.exp %105 : vector<8x8xf32>
    %107 = arith.mulf %106, %16 : vector<8x8xf32>
    %cst_28 = arith.constant dense<0.000000e+00> : vector<8xf32>
    %108 = vector.multi_reduction <add>, %107, %cst_28 [1] : vector<8x8xf32> to vector<8xf32>
    %109 = vector.shape_cast %108 : vector<8xf32> to vector<8x1xf32>
    %110 = arith.truncf %107 : vector<8x8xf32> to vector<8x8xbf16>
    %c0_29 = arith.constant 0 : index
    %c24 = arith.constant 24 : index
    %111 = vector.load %arg8[%c0_29, %c24] : memref<8x32xbf16, #tpu.memory_space<vmem>>, vector<8x8xbf16>
    %cst_30 = arith.constant dense<0.000000e+00> : vector<8x8xf32>
    %112 = tpu.matmul %110, %111, %cst_30 {dimension_numbers = #tpu.dot_dimension_numbers<[1], [0], [0], [1], [0, 0, 1, 1], [], []>} : vector<8x8xbf16>, vector<8x8xbf16>, vector<8x8xf32> -> vector<8x8xf32>
    %113 = tpu.reciprocal %109 {approx = true} : vector<8x1xf32> -> vector<8x1xf32>
    %114 = vector.broadcast %113 : vector<8x1xf32> to vector<8x8xf32>
    %115 = arith.mulf %112, %114 : vector<8x8xf32>
    %116 = tpu.concatenate %43, %67, %91, %115 in 1 : vector<8x8xf32>, vector<8x8xf32>, vector<8x8xf32>, vector<8x8xf32> -> vector<8x32xf32>
    %c0_31 = arith.constant 0 : index
    %c0_32 = arith.constant 0 : index
    %117 = vector.load %arg6[%c0_31, %c0_32] : memref<1x32xf32, #tpu.memory_space<vmem>>, vector<1x32xf32>
    %118 = vector.broadcast %117 : vector<1x32xf32> to vector<8x32xf32>
    %119 = arith.addf %116, %118 : vector<8x32xf32>
    %c0_33 = arith.constant 0 : index
    %c0_34 = arith.constant 0 : index
    %c0_35 = arith.constant 0 : index
    %120 = vector.load %arg7[%c0_33, %c0_34, %c0_35] : memref<1x8x32xf32, #tpu.memory_space<vmem>>, vector<1x8x32xf32>
    %121 = vector.shape_cast %120 : vector<1x8x32xf32> to vector<8x32xf32>
    %122 = vector.shape_cast %119 : vector<8x32xf32> to vector<1x8x32xf32>
    tpu.vector_store %arg7[%c0_33, %c0_34, %c0_35], %122 {strides = array<i32>} : memref<1x8x32xf32, #tpu.memory_space<vmem>>, vector<1x8x32xf32>,
    return
  }
  func.func @transform_0(%arg0: i32, %arg1: i32) -> (i32, i32, i32) {
    %c0_i32 = arith.constant 0 : i32
    %c0_i32_0 = arith.constant 0 : i32
    %c0_i32_1 = arith.constant 0 : i32
    return %arg0, %c0_i32, %c0_i32_0 : i32, i32, i32
  }
  func.func @transform_1(%arg0: i32, %arg1: i32) -> (i32, i32, i32) {
    %c0_i32 = arith.constant 0 : i32
    %c0_i32_0 = arith.constant 0 : i32
    return %arg0, %arg1, %c0_i32 : i32, i32, i32
  }
  func.func @transform_2(%arg0: i32, %arg1: i32) -> (i32, i32) {
    %c0_i32 = arith.constant 0 : i32
    %c0_i32_0 = arith.constant 0 : i32
    %c0_i32_1 = arith.constant 0 : i32
    return %c0_i32, %c0_i32_0 : i32, i32
  }
  func.func @transform_3(%arg0: i32, %arg1: i32) -> (i32, i32) {
    %c0_i32 = arith.constant 0 : i32
    %c0_i32_0 = arith.constant 0 : i32
    %c0_i32_1 = arith.constant 0 : i32
    return %c0_i32, %c0_i32_0 : i32, i32
  }
  func.func @transform_4(%arg0: i32, %arg1: i32) -> (i32, i32) {
    %c0_i32 = arith.constant 0 : i32
    %c0_i32_0 = arith.constant 0 : i32
    %c0_i32_1 = arith.constant 0 : i32
    return %c0_i32, %c0_i32_0 : i32, i32
  }
  func.func @transform_5(%arg0: i32, %arg1: i32) -> (i32, i32, i32) {
    %c0_i32 = arith.constant 0 : i32
    %c0_i32_0 = arith.constant 0 : i32
    return %arg0, %arg1, %c0_i32 : i32, i32, i32
  }
}

</mosaic_0001>

<llo_original>
// kernel: tpu_custom_call.1
$region0: #{tpu_custom_call.1}
  #allocation0 [shape = 'u32[]', space=smem, size = 0x4, offset = 0x4, fixed_abs, tag = 'smem constant byte address 0x4 - core index']
  #allocation1 [shape = 'u32[144,128]{1,0:T(1,128)}', space=vmem, size = 0x12000, scoped, tag = 'internal scratch']
  #allocation2 [shape = 'bf16[8,32]{1,0:T(8,128)(2,1)}', space=vmem, size = 0x800, scoped, tag = 'scratch operand']
  #allocation3 [shape = 'f32[8,4]{1,0:T(8,128)}', space=vmem, size = 0x1000, scoped, tag = 'scratch operand']
  #allocation4 [shape = 'f32[4,8]{1,0:T(4,128)}', space=vmem, size = 0x800, scoped, tag = 'scratch operand']
  %s0 = inlined_call_operand.vmem [shape: f32[2,8,16], index: 0, kind: input, shape index: {}]
  %s1 = inlined_call_operand.vmem [shape: f32[2,8,8], index: 1, kind: input, shape index: {}]
  %s2 = inlined_call_operand.hbm [shape: f32[16,32], index: 2, kind: input, shape index: {}]
  %s3 = inlined_call_operand.vmem [shape: f32[32,8], index: 3, kind: input, shape index: {}]
  %s4 = inlined_call_operand.vmem [shape: f32[1,32], index: 4, kind: input, shape index: {}]
  %s5 = inlined_call_operand.hbm [shape: f32[2,8,32], index: 5, kind: output, shape index: {}]
  %s6 = sld [smem:[#allocation0]]
  $region61: #{tpu_custom_call.1} parent=0
    _
  %s8 = ssub.s32 1, %s6
  %s9 = scalar_select 0, %s8, %s6
  $region1: #{tpu_custom_call.1} parent=0
    #allocation5 [shape = 'u8[8192]{0}', space=vmem, size = 0x2000, scoped, tag = 'input window, operand 2, single buffered']
    #allocation6 [shape = 's32[2]{0}', space=sflag, size = 0x8, scoped, tag = 'scoped memory for tpu_custom_call.1']
    #allocation7 [shape = 's32[2]{0}', space=sflag, size = 0x8, scoped, tag = 'scoped memory for tpu_custom_call.1']
    #allocation8 [shape = 'u8[8192]{0}', space=vmem, size = 0x2000, scoped, tag = 'output window, operand 0']
    %10 = vsyncpa [#allocation6], 0
    %11 = vsyncpa [#allocation7], 0
    %s12 = scalar_lea.sflag [#allocation7], 1
    %13 = vsyncpa %s12, 0
    loop: start=0, step=1, limit=4
    $region2: #{tpu_custom_call.1} parent=1 // loop_pre_header
      _
    $region3: #{tpu_custom_call.1} parent=1 // loop_header
      %s15 = sphi 0, %s19
      %p16 = scmp.ge.s32.totalorder %s15, 4
      %s22 = sphi 0, %s34
      %s23 = sphi 0, %s30
      %s24 = sphi 0, %s22
      %s25 = sphi 0, %s23
      %s26 = sphi 0, %s24
      %s27 = sphi 0, %s25
      %s37 = sphi 0, %s39
      %s40 = sphi 0, %s37
      %s41 = sphi 0, %s40
      %s57 = sphi 0, %s41
      %s65 = sphi 0, %s67
      %s68 = sphi 0, %s65
      %s69 = sphi 0, %s68
      %s85 = sphi 0, %s69
      %s89 = sphi 0, %s89
      %s91 = sphi 0, %s89
      %s92 = sphi 0, %s91
      %s106 = sphi 0, %s92
      %s110 = sphi 0, %s110
      %s112 = sphi 0, %s110
      %s113 = sphi 0, %s112
      %s127 = sphi 0, %s113
      %s131 = sphi 0, %s131
      %s133 = sphi 0, %s131
      %s134 = sphi 0, %s133
      %s148 = sphi 0, %s134
      %s156 = sphi 0, %s158
      %s159 = sphi 0, %s156
      %s160 = sphi 0, %s159
      %s176 = sphi 0, %s160
    $region4: #{tpu_custom_call.1} parent=1 // loop_header_branch
      %18 = sbr.rel (%p16) target = $region8
    $region5: #{tpu_custom_call.1} parent=1 // loop_body
      %s20 = ssub.s32 %s15, 1
      %s21 = ssub.s32 %s15, 2
      %s28 = sadd.s32 1, %s23
      %p29 = scmp.ge.s32.totalorder %s28, 1
      %s30 = scalar_select %p29, 0, %s28
      %s31 = sadd.s32 1, %s22
      %s32 = scalar_select %p29, %s31, %s22
      %p33 = scmp.ge.s32.totalorder %s32, 2
      %s34 = scalar_select %p33, 0, %s32
      %s35 = ssub.s32 %s22, %s34
      %p36 = scmp.eq.s32.totalorder %s35, 0
      %s38 = sadd.s32 %s37, 1
      %s39 = scalar_select %p36, %s37, %s38
      %p42 = pneg %p36
      %p43 = scmp.eq.s32.totalorder %s15, 1
      %p44 = por %p42, %p43
      %p45 = scmp.ne.s32.totalorder %s37, %s40
      %p46 = scmp.eq.s32.totalorder %s15, 0
      %p47 = por %p45, %p46
      %p48 = scmp.ne.s32.totalorder %s37, %s40
      %p49 = scmp.eq.s32.totalorder %s20, 1
      %p50 = por %p48, %p49
      %p51 = scmp.ne.s32.totalorder %s40, %s41
      %p52 = scmp.eq.s32.totalorder %s20, 0
      %p53 = por %p51, %p52
      %p54 = scmp.ne.s32.totalorder %s40, %s41
      %p55 = scmp.eq.s32.totalorder %s21, 1
      %p56 = por %p54, %p55
      %p58 = scmp.ne.s32.totalorder %s41, %s57
      %p59 = scmp.eq.s32.totalorder %s21, 0
      %p60 = por %p58, %p59
      %s61 = ssub.s32 %s22, %s34
      %s62 = ssub.s32 %s23, %s30
      %s63 = sor.u32 %s61, %s62
      %p64 = scmp.eq.s32.totalorder %s63, 0
      %s66 = sadd.s32 %s65, 1
      %s67 = scalar_select %p64, %s65, %s66
      %p70 = pneg %p64
      %p71 = scmp.eq.s32.totalorder %s15, 1
      %p72 = por %p70, %p71
      %p73 = scmp.ne.s32.totalorder %s65, %s68
      %p74 = scmp.eq.s32.totalorder %s15, 0
      %p75 = por %p73, %p74
      %p76 = scmp.ne.s32.totalorder %s65, %s68
      %p77 = scmp.eq.s32.totalorder %s20, 1
      %p78 = por %p76, %p77
      %p79 = scmp.ne.s32.totalorder %s68, %s69
      %p80 = scmp.eq.s32.totalorder %s20, 0
      %p81 = por %p79, %p80
      %p82 = scmp.ne.s32.totalorder %s68, %s69
      %p83 = scmp.eq.s32.totalorder %s21, 1
      %p84 = por %p82, %p83
      %p86 = scmp.ne.s32.totalorder %s69, %s85
      %p87 = scmp.eq.s32.totalorder %s21, 0
      %p88 = por %p86, %p87
      %s90 = sadd.s32 %s89, 1
      %p93 = scmp.eq.s32.totalorder %s15, 1
      %p94 = scmp.ne.s32.totalorder %s89, %s91
      %p95 = scmp.eq.s32.totalorder %s15, 0
      %p96 = por %p94, %p95
      %p97 = scmp.ne.s32.totalorder %s89, %s91
      %p98 = scmp.eq.s32.totalorder %s20, 1
      %p99 = por %p97, %p98
      %p100 = scmp.ne.s32.totalorder %s91, %s92
      %p101 = scmp.eq.s32.totalorder %s20, 0
      %p102 = por %p100, %p101
      %p103 = scmp.ne.s32.totalorder %s91, %s92
      %p104 = scmp.eq.s32.totalorder %s21, 1
      %p105 = por %p103, %p104
      %p107 = scmp.ne.s32.totalorder %s92, %s106
      %p108 = scmp.eq.s32.totalorder %s21, 0
      %p109 = por %p107, %p108
      %s111 = sadd.s32 %s110, 1
      %p114 = scmp.eq.s32.totalorder %s15, 1
      %p115 = scmp.ne.s32.totalorder %s110, %s112
      %p116 = scmp.eq.s32.totalorder %s15, 0
      %p117 = por %p115, %p116
      %p118 = scmp.ne.s32.totalorder %s110, %s112
      %p119 = scmp.eq.s32.totalorder %s20, 1
      %p120 = por %p118, %p119
      %p121 = scmp.ne.s32.totalorder %s112, %s113
      %p122 = scmp.eq.s32.totalorder %s20, 0
      %p123 = por %p121, %p122
      %p124 = scmp.ne.s32.totalorder %s112, %s113
      %p125 = scmp.eq.s32.totalorder %s21, 1
      %p126 = por %p124, %p125
      %p128 = scmp.ne.s32.totalorder %s113, %s127
      %p129 = scmp.eq.s32.totalorder %s21, 0
      %p130 = por %p128, %p129
      %s132 = sadd.s32 %s131, 1
      %p135 = scmp.eq.s32.totalorder %s15, 1
      %p136 = scmp.ne.s32.totalorder %s131, %s133
      %p137 = scmp.eq.s32.totalorder %s15, 0
      %p138 = por %p136, %p137
      %p139 = scmp.ne.s32.totalorder %s131, %s133
      %p140 = scmp.eq.s32.totalorder %s20, 1
      %p141 = por %p139, %p140
      %p142 = scmp.ne.s32.totalorder %s133, %s134
      %p143 = scmp.eq.s32.totalorder %s20, 0
      %p144 = por %p142, %p143
      %p145 = scmp.ne.s32.totalorder %s133, %s134
      %p146 = scmp.eq.s32.totalorder %s21, 1
      %p147 = por %p145, %p146
      %p149 = scmp.ne.s32.totalorder %s134, %s148
      %p150 = scmp.eq.s32.totalorder %s21, 0
      %p151 = por %p149, %p150
      %s152 = ssub.s32 %s22, %s34
      %s153 = ssub.s32 %s23, %s30
      %s154 = sor.u32 %s152, %s153
      %p155 = scmp.eq.s32.totalorder %s154, 0
      %s157 = sadd.s32 %s156, 1
      %s158 = scalar_select %p155, %s156, %s157
      %p161 = pneg %p155
      %p162 = scmp.eq.s32.totalorder %s15, 1
      %p163 = por %p161, %p162
      %p164 = scmp.ne.s32.totalorder %s156, %s159
      %p165 = scmp.eq.s32.totalorder %s15, 0
      %p166 = por %p164, %p165
      %p167 = scmp.ne.s32.totalorder %s156, %s159
      %p168 = scmp.eq.s32.totalorder %s20, 1
      %p169 = por %p167, %p168
      %p170 = scmp.ne.s32.totalorder %s159, %s160
      %p171 = scmp.eq.s32.totalorder %s20, 0
      %p172 = por %p170, %p171
      %p173 = scmp.ne.s32.totalorder %s159, %s160
      %p174 = scmp.eq.s32.totalorder %s21, 1
      %p175 = por %p173, %p174
      %p177 = scmp.ne.s32.totalorder %s160, %s176
      %p178 = scmp.eq.s32.totalorder %s21, 0
      %p179 = por %p177, %p178
      %p180 = scmp.le.s32.totalorder 1, %s15
      %p181 = scmp.lt.s32.totalorder %s15, 3
      %p182 = pnand %p180, %p181
      %p183 = pneg %p182
      // Predicated region
      $region9: #{tpu_custom_call.1} parent=5 // pred_check
        _
      $region10: #{tpu_custom_call.1} parent=5 // pred_check_branch
        %185 = sbr.rel (%p182) target = $region12
      $region11: #{tpu_custom_call.1} parent=5 // pred_region
        %s186 = ssub.s32 %s15, 1
        // Predicated region
        $region13: #{tpu_custom_call.1} parent=11 // pred_check
          %p187 = pneg %p102
        $region14: #{tpu_custom_call.1} parent=11 // pred_check_branch
          %189 = sbr.rel (%p187) target = $region16
        $region15: #{tpu_custom_call.1} parent=11 // pred_region
          %s191 = ssub.s32 256, 256
          %192 = vsyncadd [#allocation6], %s191
          %s193 = sshll.u32 [#allocation5], 4
          %s194 = int_to_ptr.vmem [resolvable:$true] %s193
          %199 = dma.hbm_to_vmem [thread:$0]  %s2, 256, %s194, [#allocation6], 128, 128, 8
        $region16: #{tpu_custom_call.1} parent=11 // pred_fallthru
          _
        // Predicated region
        $region17: #{tpu_custom_call.1} parent=11 // pred_check
          %p200 = pneg %p123
        $region18: #{tpu_custom_call.1} parent=11 // pred_check_branch
          %202 = sbr.rel (%p200) target = $region20
        $region19: #{tpu_custom_call.1} parent=11 // pred_region
          _
        $region20: #{tpu_custom_call.1} parent=11 // pred_fallthru
          _
        // Predicated region
        $region21: #{tpu_custom_call.1} parent=11 // pred_check
          %p203 = pneg %p144
        $region22: #{tpu_custom_call.1} parent=11 // pred_check_branch
          %205 = sbr.rel (%p203) target = $region24
        $region23: #{tpu_custom_call.1} parent=11 // pred_region
          _
        $region24: #{tpu_custom_call.1} parent=11 // pred_fallthru
          _
      $region12: #{tpu_custom_call.1} parent=5 // pred_fallthru
        _
      %p206 = scmp.lt.s32.totalorder %s15, 2
      // Predicated region
      $region25: #{tpu_custom_call.1} parent=5 // pred_check
        %p207 = pneg %p206
      $region26: #{tpu_custom_call.1} parent=5 // pred_check_branch
        %209 = sbr.rel (%p207) target = $region28
      $region27: #{tpu_custom_call.1} parent=5 // pred_region
        // Predicated region
        $region29: #{tpu_custom_call.1} parent=27 // pred_check
          %p210 = pneg %p47
        $region30: #{tpu_custom_call.1} parent=27 // pred_check_branch
          %212 = sbr.rel (%p210) target = $region32
        $region31: #{tpu_custom_call.1} parent=27 // pred_region
          %p213 = scmp.lt.s32.totalorder %s22, 1
          %s214 = scalar_select %p213, %s22, 1
          %s215 = smul.addr %s214, 8
          %s216 = scalar_lea.vmem %s0, %s215
        $region32: #{tpu_custom_call.1} parent=27 // pred_fallthru
          _
        // Predicated region
        $region33: #{tpu_custom_call.1} parent=27 // pred_check
          %p217 = pneg %p75
        $region34: #{tpu_custom_call.1} parent=27 // pred_check_branch
          %219 = sbr.rel (%p217) target = $region36
        $region35: #{tpu_custom_call.1} parent=27 // pred_region
          %p220 = scmp.lt.s32.totalorder %s22, 1
          %s221 = scalar_select %p220, %s22, 1
          %p222 = scmp.lt.s32.totalorder %s23, 0
          %s223 = scalar_select %p222, %s23, 0
          %s224 = sadd.s32 %s223, %s221
          %s225 = smul.addr %s224, 8
          %s226 = scalar_lea.vmem %s1, %s225
        $region36: #{tpu_custom_call.1} parent=27 // pred_fallthru
          _
      $region28: #{tpu_custom_call.1} parent=5 // pred_fallthru
        _
      %p227 = scmp.le.s32.totalorder 1, %s15
      %p228 = scmp.lt.s32.totalorder %s15, 3
      %p229 = pnand %p227, %p228
      %p230 = pneg %p229
      // Predicated region
      $region37: #{tpu_custom_call.1} parent=5 // pred_check
        _
      $region38: #{tpu_custom_call.1} parent=5 // pred_check_branch
        %232 = sbr.rel (%p229) target = $region40
      $region39: #{tpu_custom_call.1} parent=5 // pred_region
        %s233 = ssub.s32 %s15, 1
        // Predicated region
        $region41: #{tpu_custom_call.1} parent=39 // pred_check
          %p234 = pneg %p102
        $region42: #{tpu_custom_call.1} parent=39 // pred_check_branch
          %236 = sbr.rel (%p234) target = $region44
        $region43: #{tpu_custom_call.1} parent=39 // pred_region
          %237 = dma.done [#allocation6], 256
        $region44: #{tpu_custom_call.1} parent=39 // pred_fallthru
          _
        %p238 = scmp.lt.s32.totalorder %s24, 1
        %s239 = scalar_select %p238, %s24, 1
        %s240 = smul.addr %s239, 8
        %s241 = scalar_lea.vmem %s0, %s240
        %p242 = pneg %p53
        %p243 = pneg %p50
        %p244 = scmp.lt.s32.totalorder %s24, 1
        %s245 = scalar_select %p244, %s24, 1
        %p246 = scmp.lt.s32.totalorder %s25, 0
        %s247 = scalar_select %p246, %s25, 0
        %s248 = sadd.s32 %s247, %s245
        %s249 = smul.addr %s248, 8
        %s250 = scalar_lea.vmem %s1, %s249
        %p251 = pneg %p81
        %p252 = pneg %p78
        %p253 = pneg %p102
        %p254 = pneg %p99
        %p255 = pneg %p123
        %p256 = pneg %p120
        %p257 = pneg %p144
        %p258 = pneg %p141
        %p259 = pneg %p172
        %p260 = pneg %p169
        %s261 = sand.u32 %s159, 1
        %s262 = scalar_lea.sflag [#allocation7], %s261
        %s263 = sand.u32 %s159, 1
        %s264 = smul.addr %s263, 8
        %s265 = scalar_lea.vmem [#allocation8], %s264
        %p266 = scmp.lt.s32.totalorder %s24, 1
        %s267 = scalar_select %p266, %s24, 1
        %s268 = smul.addr %s267, 8
        %s269 = scalar_lea.vmem %s0, %s268
        %p270 = scmp.lt.s32.totalorder %s24, 1
        %s271 = scalar_select %p270, %s24, 1
        %p272 = scmp.lt.s32.totalorder %s25, 0
        %s273 = scalar_select %p272, %s25, 0
        %s274 = sadd.s32 %s273, %s271
        %s275 = smul.addr %s274, 8
        %s276 = scalar_lea.vmem %s1, %s275
        %s278 = smul.u32 %s25, 8
        %p279 = scmp.eq.s32.totalorder %s25, 0
        // Predicated region
        $region45: #{tpu_custom_call.1} parent=39 // pred_check
          %p280 = pneg %p279
        $region46: #{tpu_custom_call.1} parent=39 // pred_check_branch
          %282 = sbr.rel (%p280) target = $region48
        $region47: #{tpu_custom_call.1} parent=39 // pred_region
          %v283 = vld [vmem:[%s269] sm:$0xff]
          %v284 = vld [vmem:[#allocation5] sm:$0xff]
          %v285 = vld [vmem:[#allocation5 + $0x8] sm:$0xff]
          %vm286 = vcmask 130048
          %v288 = vsel %vm286, %v283, 0
          %290 = vmatprep.subr.mxu0 0.0
          %291 = vmatpush1.msra.mxu0 0.0
          %292 = vmatprep.subr.mxu0 0.0
          %293 = vmatpush1.msra.mxu0 0.0
          %294 = vmatprep.subr.mxu0 0.0
          %295 = vmatpush1.msra.mxu0 0.0
          %296 = vmatprep.subr.mxu0 0.0
          %297 = vmatpush1.msra.mxu0 0.0
          %298 = vmatprep.subr.mxu0 0.0
          %299 = vmatpush1.msra.mxu0 0.0
          %300 = vmatprep.subr.mxu0 0.0
          %301 = vmatpush1.msra.mxu0 0.0
          %302 = vmatprep.subr.mxu0 0.0
          %303 = vmatpush1.msra.mxu0 0.0
          %304 = vmatprep.subr.mxu0 0.0
          %305 = vmatpush1.msra.mxu0 0.0
          %306 = vmatprep.subr.mxu0 0.0
          %307 = vmatpush1.msra.mxu0 0.0
          %308 = vmatprep.subr.mxu0 0.0
          %309 = vmatpush1.msra.mxu0 0.0
          %310 = vmatprep.subr.mxu0 0.0
          %311 = vmatpush1.msra.mxu0 0.0
          %312 = vmatprep.subr.mxu0 0.0
          %313 = vmatpush1.msra.mxu0 0.0
          %314 = vmatprep.subr.mxu0 0.0
          %315 = vmatpush1.msra.mxu0 0.0
          %316 = vmatprep.subr.mxu0 0.0
          %317 = vmatpush1.msra.mxu0 0.0
          %318 = vmatprep.subr.mxu0 0.0
          %319 = vmatpush1.msra.mxu0 %v285
          %320 = vmatprep.subr.mxu0 0.0
          %321 = vmatpush1.msra.mxu0 %v284
          %322 = vmatprep.subr.mxu0 0.0
          %323 = vmatpush2.msra.mxu0 0.0
          %324 = vmatprep.subr.mxu0 0.0
          %325 = vmatpush2.msra.mxu0 0.0
          %326 = vmatprep.subr.mxu0 0.0
          %327 = vmatpush2.msra.mxu0 0.0
          %328 = vmatprep.subr.mxu0 0.0
          %329 = vmatpush2.msra.mxu0 0.0
          %330 = vmatprep.subr.mxu0 0.0
          %331 = vmatpush2.msra.mxu0 0.0
          %332 = vmatprep.subr.mxu0 0.0
          %333 = vmatpush2.msra.mxu0 0.0
          %334 = vmatprep.subr.mxu0 0.0
          %335 = vmatpush2.msra.mxu0 0.0
          %336 = vmatprep.subr.mxu0 0.0
          %337 = vmatpush2.msra.mxu0 0.0
          %338 = vmatprep.subr.mxu0 0.0
          %339 = vmatpush2.msra.mxu0 0.0
          %340 = vmatprep.subr.mxu0 0.0
          %341 = vmatpush2.msra.mxu0 0.0
          %342 = vmatprep.subr.mxu0 0.0
          %343 = vmatpush2.msra.mxu0 0.0
          %344 = vmatprep.subr.mxu0 0.0
          %345 = vmatpush2.msra.mxu0 0.0
          %346 = vmatprep.subr.mxu0 0.0
          %347 = vmatpush2.msra.mxu0 0.0
          %348 = vmatprep.subr.mxu0 0.0
          %349 = vmatpush2.msra.mxu0 0.0
          %350 = vmatprep.subr.mxu0 0.0
          %351 = vmatpush2.msra.mxu0 0.0
          %352 = vmatprep.subr.mxu0 0.0
          %353 = vmatpush2.msra.mxu0 0.0
          %354 = vmatprep.mubr.f32.mxu0 0.0
          %355 = vmatmul.mubr.f32.gmra.mxu0 %v288
          %v356 = vpop.f32.mrf.mxu0
          %v357 = vadd.f32 0.0, %v356
          %v358 = vpop.f32.mrf.mxu0
          %359 = vdwg.mxu0
          %v360 = vpack.c.bf16 %v357, %v357
          %vm361 = vcmask 257024
          %362 = vst.msk [vmem:[#allocation2] sm:$0xf] %vm361, %v360
          %v363 = vld [vmem:[%s3] sm:$0xff]
          %v364 = vld [vmem:[%s3 + $0x8] sm:$0xff]
          %v365 = vld [vmem:[%s3 + $0x10] sm:$0xff]
          %v366 = vld [vmem:[%s3 + $0x18] sm:$0xff]
          %vm367 = vcmask 261120
          %v369 = vsel %vm367, %v357, 0
          %371 = vmatprep.subr.mxu0 0.0
          %372 = vmatpush1.msra.mxu0 0.0
          %373 = vmatprep.subr.mxu0 0.0
          %374 = vmatpush1.msra.mxu0 0.0
          %375 = vmatprep.subr.mxu0 0.0
          %376 = vmatpush1.msra.mxu0 0.0
          %377 = vmatprep.subr.mxu0 0.0
          %378 = vmatpush1.msra.mxu0 0.0
          %379 = vmatprep.subr.mxu0 0.0
          %380 = vmatpush1.msra.mxu0 0.0
          %381 = vmatprep.subr.mxu0 0.0
          %382 = vmatpush1.msra.mxu0 0.0
          %383 = vmatprep.subr.mxu0 0.0
          %384 = vmatpush1.msra.mxu0 0.0
          %385 = vmatprep.subr.mxu0 0.0
          %386 = vmatpush1.msra.mxu0 0.0
          %387 = vmatprep.subr.mxu0 0.0
          %388 = vmatpush1.msra.mxu0 0.0
          %389 = vmatprep.subr.mxu0 0.0
          %390 = vmatpush1.msra.mxu0 0.0
          %391 = vmatprep.subr.mxu0 0.0
          %392 = vmatpush1.msra.mxu0 0.0
          %393 = vmatprep.subr.mxu0 0.0
          %394 = vmatpush1.msra.mxu0 0.0
          %395 = vmatprep.subr.mxu0 0.0
          %396 = vmatpush1.msra.mxu0 %v366
          %397 = vmatprep.subr.mxu0 0.0
          %398 = vmatpush1.msra.mxu0 %v365
          %399 = vmatprep.subr.mxu0 0.0
          %400 = vmatpush1.msra.mxu0 %v364
          %401 = vmatprep.subr.mxu0 0.0
          %402 = vmatpush1.msra.mxu0 %v363
          %403 = vmatprep.subr.mxu0 0.0
          %404 = vmatpush2.msra.mxu0 0.0
          %405 = vmatprep.subr.mxu0 0.0
          %406 = vmatpush2.msra.mxu0 0.0
          %407 = vmatprep.subr.mxu0 0.0
          %408 = vmatpush2.msra.mxu0 0.0
          %409 = vmatprep.subr.mxu0 0.0
          %410 = vmatpush2.msra.mxu0 0.0
          %411 = vmatprep.subr.mxu0 0.0
          %412 = vmatpush2.msra.mxu0 0.0
          %413 = vmatprep.subr.mxu0 0.0
          %414 = vmatpush2.msra.mxu0 0.0
          %415 = vmatprep.subr.mxu0 0.0
          %416 = vmatpush2.msra.mxu0 0.0
          %417 = vmatprep.subr.mxu0 0.0
          %418 = vmatpush2.msra.mxu0 0.0
          %419 = vmatprep.subr.mxu0 0.0
          %420 = vmatpush2.msra.mxu0 0.0
          %421 = vmatprep.subr.mxu0 0.0
          %422 = vmatpush2.msra.mxu0 0.0
          %423 = vmatprep.subr.mxu0 0.0
          %424 = vmatpush2.msra.mxu0 0.0
          %425 = vmatprep.subr.mxu0 0.0
          %426 = vmatpush2.msra.mxu0 0.0
          %427 = vmatprep.subr.mxu0 0.0
          %428 = vmatpush2.msra.mxu0 0.0
          %429 = vmatprep.subr.mxu0 0.0
          %430 = vmatpush2.msra.mxu0 0.0
          %431 = vmatprep.subr.mxu0 0.0
          %432 = vmatpush2.msra.mxu0 0.0
          %433 = vmatprep.subr.mxu0 0.0
          %434 = vmatpush2.msra.mxu0 0.0
          %435 = vmatprep.mubr.f32.mxu0 0.0
          %436 = vmatmul.mubr.f32.gmra.mxu0 %v369
          %v437 = vpop.f32.mrf.mxu0
          %v438 = vadd.f32 0.0, %v437
          %v439 = vpop.f32.mrf.mxu0
          %440 = vdwg.mxu0
          %442 = vrot.lane.b32.xlu0 %v438, 124
          %v443 = vpop.permute.xlu0 %442
          %vm445 = vcmask 31744
          %446 = vst.msk [vmem:[#allocation3] sm:$0xff] %vm445, %v443
          %447 = vxpose.xlu0.b32.start [1/16] %v438, 128
          %448 = vxpose.xlu0.b32.cont [2/16] 0.0, 128
          %449 = vxpose.xlu0.b32.cont [3/16] 0.0, 128
          %450 = vxpose.xlu0.b32.cont [4/16] 0.0, 128
          %451 = vxpose.xlu0.b32.cont [5/16] 0.0, 128
          %452 = vxpose.xlu0.b32.cont [6/16] 0.0, 128
          %453 = vxpose.xlu0.b32.cont [7/16] 0.0, 128
          %454 = vxpose.xlu0.b32.cont [8/16] 0.0, 128
          %455 = vxpose.xlu0.b32.cont [9/16] 0.0, 128
          %456 = vxpose.xlu0.b32.cont [10/16] 0.0, 128
          %457 = vxpose.xlu0.b32.cont [11/16] 0.0, 128
          %458 = vxpose.xlu0.b32.cont [12/16] 0.0, 128
          %459 = vxpose.xlu0.b32.cont [13/16] 0.0, 128
          %460 = vxpose.xlu0.b32.cont [14/16] 0.0, 128
          %461 = vxpose.xlu0.b32.cont [15/16] 0.0, 128
          %462 = vxpose.xlu0.b32.end [16/16] 0.0, 128
          %v463 = vpop.trf.xlu0
          %v464 = vpop.trf.xlu0
          %v465 = vpop.trf.xlu0
          %v466 = vpop.trf.xlu0
          %v467 = vpop.trf.xlu0
          %v468 = vpop.trf.xlu0
          %v469 = vpop.trf.xlu0
          %v470 = vpop.trf.xlu0
          %v471 = vpop.trf.xlu0
          %v472 = vpop.trf.xlu0
          %v473 = vpop.trf.xlu0
          %v474 = vpop.trf.xlu0
          %v475 = vpop.trf.xlu0
          %v476 = vpop.trf.xlu0
          %v477 = vpop.trf.xlu0
          %v478 = vpop.trf.xlu0
          %479 = vrot.lane.b32.xlu0 %v438, 127
          %v480 = vpop.permute.xlu0 %479
          %482 = vxpose.xlu0.b32.start [1/16] %v480, 128
          %483 = vxpose.xlu0.b32.cont [2/16] 0.0, 128
          %484 = vxpose.xlu0.b32.cont [3/16] 0.0, 128
          %485 = vxpose.xlu0.b32.cont [4/16] 0.0, 128
          %486 = vxpose.xlu0.b32.cont [5/16] 0.0, 128
          %487 = vxpose.xlu0.b32.cont [6/16] 0.0, 128
          %488 = vxpose.xlu0.b32.cont [7/16] 0.0, 128
          %489 = vxpose.xlu0.b32.cont [8/16] 0.0, 128
          %490 = vxpose.xlu0.b32.cont [9/16] 0.0, 128
          %491 = vxpose.xlu0.b32.cont [10/16] 0.0, 128
          %492 = vxpose.xlu0.b32.cont [11/16] 0.0, 128
          %493 = vxpose.xlu0.b32.cont [12/16] 0.0, 128
          %494 = vxpose.xlu0.b32.cont [13/16] 0.0, 128
          %495 = vxpose.xlu0.b32.cont [14/16] 0.0, 128
          %496 = vxpose.xlu0.b32.cont [15/16] 0.0, 128
          %497 = vxpose.xlu0.b32.end [16/16] 0.0, 128
          %v498 = vpop.trf.xlu0
          %v499 = vpop.trf.xlu0
          %v500 = vpop.trf.xlu0
          %v501 = vpop.trf.xlu0
          %v502 = vpop.trf.xlu0
          %v503 = vpop.trf.xlu0
          %v504 = vpop.trf.xlu0
          %v505 = vpop.trf.xlu0
          %v506 = vpop.trf.xlu0
          %v507 = vpop.trf.xlu0
          %v508 = vpop.trf.xlu0
          %v509 = vpop.trf.xlu0
          %v510 = vpop.trf.xlu0
          %v511 = vpop.trf.xlu0
          %v512 = vpop.trf.xlu0
          %v513 = vpop.trf.xlu0
          %514 = vrot.lane.b32.xlu0 %v438, 126
          %v515 = vpop.permute.xlu0 %514
          %517 = vxpose.xlu0.b32.start [1/16] %v515, 128
          %518 = vxpose.xlu0.b32.cont [2/16] 0.0, 128
          %519 = vxpose.xlu0.b32.cont [3/16] 0.0, 128
          %520 = vxpose.xlu0.b32.cont [4/16] 0.0, 128
          %521 = vxpose.xlu0.b32.cont [5/16] 0.0, 128
          %522 = vxpose.xlu0.b32.cont [6/16] 0.0, 128
          %523 = vxpose.xlu0.b32.cont [7/16] 0.0, 128
          %524 = vxpose.xlu0.b32.cont [8/16] 0.0, 128
          %525 = vxpose.xlu0.b32.cont [9/16] 0.0, 128
          %526 = vxpose.xlu0.b32.cont [10/16] 0.0, 128
          %527 = vxpose.xlu0.b32.cont [11/16] 0.0, 128
          %528 = vxpose.xlu0.b32.cont [12/16] 0.0, 128
          %529 = vxpose.xlu0.b32.cont [13/16] 0.0, 128
          %530 = vxpose.xlu0.b32.cont [14/16] 0.0, 128
          %531 = vxpose.xlu0.b32.cont [15/16] 0.0, 128
          %532 = vxpose.xlu0.b32.end [16/16] 0.0, 128
          %v533 = vpop.trf.xlu0
          %v534 = vpop.trf.xlu0
          %v535 = vpop.trf.xlu0
          %v536 = vpop.trf.xlu0
          %v537 = vpop.trf.xlu0
          %v538 = vpop.trf.xlu0
          %v539 = vpop.trf.xlu0
          %v540 = vpop.trf.xlu0
          %v541 = vpop.trf.xlu0
          %v542 = vpop.trf.xlu0
          %v543 = vpop.trf.xlu0
          %v544 = vpop.trf.xlu0
          %v545 = vpop.trf.xlu0
          %v546 = vpop.trf.xlu0
          %v547 = vpop.trf.xlu0
          %v548 = vpop.trf.xlu0
          %549 = vrot.lane.b32.xlu0 %v438, 125
          %v550 = vpop.permute.xlu0 %549
          %552 = vxpose.xlu0.b32.start [1/16] %v550, 128
          %553 = vxpose.xlu0.b32.cont [2/16] 0.0, 128
          %554 = vxpose.xlu0.b32.cont [3/16] 0.0, 128
          %555 = vxpose.xlu0.b32.cont [4/16] 0.0, 128
          %556 = vxpose.xlu0.b32.cont [5/16] 0.0, 128
          %557 = vxpose.xlu0.b32.cont [6/16] 0.0, 128
          %558 = vxpose.xlu0.b32.cont [7/16] 0.0, 128
          %559 = vxpose.xlu0.b32.cont [8/16] 0.0, 128
          %560 = vxpose.xlu0.b32.cont [9/16] 0.0, 128
          %561 = vxpose.xlu0.b32.cont [10/16] 0.0, 128
          %562 = vxpose.xlu0.b32.cont [11/16] 0.0, 128
          %563 = vxpose.xlu0.b32.cont [12/16] 0.0, 128
          %564 = vxpose.xlu0.b32.cont [13/16] 0.0, 128
          %565 = vxpose.xlu0.b32.cont [14/16] 0.0, 128
          %566 = vxpose.xlu0.b32.cont [15/16] 0.0, 128
          %567 = vxpose.xlu0.b32.end [16/16] 0.0, 128
          %v568 = vpop.trf.xlu0
          %v569 = vpop.trf.xlu0
          %v570 = vpop.trf.xlu0
          %v571 = vpop.trf.xlu0
          %v572 = vpop.trf.xlu0
          %v573 = vpop.trf.xlu0
          %v574 = vpop.trf.xlu0
          %v575 = vpop.trf.xlu0
          %v576 = vpop.trf.xlu0
          %v577 = vpop.trf.xlu0
          %v578 = vpop.trf.xlu0
          %v579 = vpop.trf.xlu0
          %v580 = vpop.trf.xlu0
          %v581 = vpop.trf.xlu0
          %v582 = vpop.trf.xlu0
          %v583 = vpop.trf.xlu0
          %v585 = vrot.slane %v498, 7
          %v588 = vrot.slane %v533, 6
          %v591 = vrot.slane %v568, 5
          %vm593 = vcmask 1040384
          %v594 = vsel %vm593, %v463, %v585
          %vm595 = vcmask 1041408
          %v596 = vsel %vm595, %v594, %v588
          %vm597 = vcmask 1042432
          %v598 = vsel %vm597, %v596, %v591
          %vm599 = vcmask 60416
          %600 = vst.msk [vmem:[#allocation4] sm:$0xf] %vm599, %v598
        $region48: #{tpu_custom_call.1} parent=39 // pred_fallthru
          _
        %v601 = vld [vmem:[%s276] sm:$0xff]
        %v602 = vlaneseq
        %v603 = vshrl.u32 %v602, 7
        %v604 = vstv %s278
        %v605 = vadd.s32 %v604, %v603
        %v606 = vlaneseq
        %v607 = vand.u32 %v606, 127
        %vm608 = vcmp.ne.f32.partialorder %v601, 0.0
        %vm609 = vcmp.eq.s32.totalorder %v605, %v607
        %vm610 = vmor %vm608, %vm609
        %v611 = vsel %vm610, 1, 0
        %v612 = vcvt.s32.f32 %v611
        %s613 = scalar_lea.vmem [#allocation3], %s278
        %v614 = vld [vmem:[%s613] sm:$0xff]
        %v615 = vld [vmem:[#allocation4] sm:$0xf]
        %617 = vset.pattern.permute.xlu0 0
        %618 = vperm.xlu0 %617, %v614
        %v619 = vpop.permute.xlu0 %618
        %v621 = vlaneseq
        %v622 = vshrl.u32 %v621, 7
        %v623 = vsub.s32 0, %v622
        %v624 = vrot.slane %v615, %v623
        %v625 = vadd.f32 %v619, %v624
        %vm626 = vcmp.gt.f32.partialorder %v625, 0.0
        %v627 = vmul.f32 %v625, 0.2
        %v628 = vsel %vm626, %v625, %v627
        %vm629 = vcmask 64512
        %v630 = vsel %vm629, %v628, -inf
        %631 = vmax.xlane.f32.xlu0 %v630
        %v632 = vpop.xlane.xlu0 %631
        %v633 = vsub.f32 %v628, %v632
        %v634 = vmul.f32 %v633, 1.442695
        %v635 = vpow.pop %v634
        %v636 = vmul.f32 %v635, %v612
        %v637 = vsel %vm629, %v636, 0.0
        %638 = vadd.xlane.f32.xlu0 %v637
        %v639 = vpop.xlane.xlu0 %638
        %v640 = vpack.c.bf16 %v636, %v636
        %v641 = vld [vmem:[#allocation2] sm:$0xf]
        %v643 = vsel %vm629, %v640, 0
        %vm645 = vcmask 1043456
        %v647 = vsel %vm645, %v641, 0
        %649 = vmatprep.subr.bf16.mxu0 0
        %650 = vmatpush1.bf16.msra.mxu0 0
        %651 = vmatprep.subr.bf16.mxu0 0
        %652 = vmatpush1.bf16.msra.mxu0 0
        %653 = vmatprep.subr.bf16.mxu0 0
        %654 = vmatpush1.bf16.msra.mxu0 0
        %655 = vmatprep.subr.bf16.mxu0 0
        %656 = vmatpush1.bf16.msra.mxu0 0
        %657 = vmatprep.subr.bf16.mxu0 0
        %658 = vmatpush1.bf16.msra.mxu0 0
        %659 = vmatprep.subr.bf16.mxu0 0
        %660 = vmatpush1.bf16.msra.mxu0 0
        %661 = vmatprep.subr.bf16.mxu0 0
        %662 = vmatpush1.bf16.msra.mxu0 0
        %663 = vmatprep.subr.bf16.mxu0 0
        %664 = vmatpush1.bf16.msra.mxu0 %v647
        %665 = vmatprep.subr.bf16.mxu0 0
        %666 = vmatpush2.bf16.msra.mxu0 0
        %667 = vmatprep.subr.bf16.mxu0 0
        %668 = vmatpush2.bf16.msra.mxu0 0
        %669 = vmatprep.subr.bf16.mxu0 0
        %670 = vmatpush2.bf16.msra.mxu0 0
        %671 = vmatprep.subr.bf16.mxu0 0
        %672 = vmatpush2.bf16.msra.mxu0 0
        %673 = vmatprep.subr.bf16.mxu0 0
        %674 = vmatpush2.bf16.msra.mxu0 0
        %675 = vmatprep.subr.bf16.mxu0 0
        %676 = vmatpush2.bf16.msra.mxu0 0
        %677 = vmatprep.subr.bf16.mxu0 0
        %678 = vmatpush2.bf16.msra.mxu0 0
        %679 = vmatprep.subr.bf16.mxu0 0
        %680 = vmatpush2.bf16.msra.mxu0 0
        %681 = vmatprep.mubr.bf16.mxu0 0
        %682 = vmatmul.mubr.bf16.gmra.mxu0 %v643
        %v683 = vpop.f32.mrf.mxu0
        %v684 = vadd.f32 0.0, %v683
        %v685 = vpop.f32.mrf.mxu0
        %v686 = vpop.f32.mrf.mxu0
        %v687 = vpop.f32.mrf.mxu0
        %688 = vdwg.mxu0
        %v689 = vrcp.pop %v639
        %v690 = vmul.f32 %v684, %v689
        %691 = vset.pattern.permute.xlu0 1
        %692 = vperm.xlu0 %691, %v614
        %v693 = vpop.permute.xlu0 %692
        %v695 = vlaneseq
        %v696 = vshrl.u32 %v695, 7
        %v697 = vsub.s32 1, %v696
        %v698 = vrot.slane %v615, %v697
        %v699 = vadd.f32 %v693, %v698
        %vm700 = vcmp.gt.f32.partialorder %v699, 0.0
        %v701 = vmul.f32 %v699, 0.2
        %v702 = vsel %vm700, %v699, %v701
        %v703 = vsel %vm629, %v702, -inf
        %704 = vmax.xlane.f32.xlu0 %v703
        %v705 = vpop.xlane.xlu0 %704
        %v706 = vsub.f32 %v702, %v705
        %v707 = vmul.f32 %v706, 1.442695
        %v708 = vpow.pop %v707
        %v709 = vmul.f32 %v708, %v612
        %v710 = vsel %vm629, %v709, 0.0
        %711 = vadd.xlane.f32.xlu0 %v710
        %v712 = vpop.xlane.xlu0 %711
        %v713 = vpack.c.bf16 %v709, %v709
        %v715 = vunpack.c.l.b16 %v641
        %v716 = vpack.c.b16 %v715, %v715
        %717 = vrot.lane.b32.xlu0 %v716, 120
        %v718 = vpop.permute.xlu0 %717
        %v720 = vsel %vm629, %v713, 0
        %v723 = vsel %vm645, %v718, 0
        %725 = vmatprep.subr.bf16.mxu0 0
        %726 = vmatpush1.bf16.msra.mxu0 0
        %727 = vmatprep.subr.bf16.mxu0 0
        %728 = vmatpush1.bf16.msra.mxu0 0
        %729 = vmatprep.subr.bf16.mxu0 0
        %730 = vmatpush1.bf16.msra.mxu0 0
        %731 = vmatprep.subr.bf16.mxu0 0
        %732 = vmatpush1.bf16.msra.mxu0 0
        %733 = vmatprep.subr.bf16.mxu0 0
        %734 = vmatpush1.bf16.msra.mxu0 0
        %735 = vmatprep.subr.bf16.mxu0 0
        %736 = vmatpush1.bf16.msra.mxu0 0
        %737 = vmatprep.subr.bf16.mxu0 0
        %738 = vmatpush1.bf16.msra.mxu0 0
        %739 = vmatprep.subr.bf16.mxu0 0
        %740 = vmatpush1.bf16.msra.mxu0 %v723
        %741 = vmatprep.subr.bf16.mxu0 0
        %742 = vmatpush2.bf16.msra.mxu0 0
        %743 = vmatprep.subr.bf16.mxu0 0
        %744 = vmatpush2.bf16.msra.mxu0 0
        %745 = vmatprep.subr.bf16.mxu0 0
        %746 = vmatpush2.bf16.msra.mxu0 0
        %747 = vmatprep.subr.bf16.mxu0 0
        %748 = vmatpush2.bf16.msra.mxu0 0
        %749 = vmatprep.subr.bf16.mxu0 0
        %750 = vmatpush2.bf16.msra.mxu0 0
        %751 = vmatprep.subr.bf16.mxu0 0
        %752 = vmatpush2.bf16.msra.mxu0 0
        %753 = vmatprep.subr.bf16.mxu0 0
        %754 = vmatpush2.bf16.msra.mxu0 0
        %755 = vmatprep.subr.bf16.mxu0 0
        %756 = vmatpush2.bf16.msra.mxu0 0
        %757 = vmatprep.mubr.bf16.mxu0 0
        %758 = vmatmul.mubr.bf16.gmra.mxu0 %v720
        %v759 = vpop.f32.mrf.mxu0
        %v760 = vadd.f32 0.0, %v759
        %v761 = vpop.f32.mrf.mxu0
        %v762 = vpop.f32.mrf.mxu0
        %v763 = vpop.f32.mrf.mxu0
        %764 = vdwg.mxu0
        %v765 = vrcp.pop %v712
        %v766 = vmul.f32 %v760, %v765
        %767 = vset.pattern.permute.xlu0 2
        %768 = vperm.xlu0 %767, %v614
        %v769 = vpop.permute.xlu0 %768
        %v771 = vlaneseq
        %v772 = vshrl.u32 %v771, 7
        %v773 = vsub.s32 2, %v772
        %v774 = vrot.slane %v615, %v773
        %v775 = vadd.f32 %v769, %v774
        %vm776 = vcmp.gt.f32.partialorder %v775, 0.0
        %v777 = vmul.f32 %v775, 0.2
        %v778 = vsel %vm776, %v775, %v777
        %v779 = vsel %vm629, %v778, -inf
        %780 = vmax.xlane.f32.xlu0 %v779
        %v781 = vpop.xlane.xlu0 %780
        %v782 = vsub.f32 %v778, %v781
        %v783 = vmul.f32 %v782, 1.442695
        %v784 = vpow.pop %v783
        %v785 = vmul.f32 %v784, %v612
        %v786 = vsel %vm629, %v785, 0.0
        %787 = vadd.xlane.f32.xlu0 %v786
        %v788 = vpop.xlane.xlu0 %787
        %v789 = vpack.c.bf16 %v785, %v785
        %790 = vrot.lane.b32.xlu0 %v716, 112
        %v791 = vpop.permute.xlu0 %790
        %v793 = vsel %vm629, %v789, 0
        %v796 = vsel %vm645, %v791, 0
        %798 = vmatprep.subr.bf16.mxu0 0
        %799 = vmatpush1.bf16.msra.mxu0 0
        %800 = vmatprep.subr.bf16.mxu0 0
        %801 = vmatpush1.bf16.msra.mxu0 0
        %802 = vmatprep.subr.bf16.mxu0 0
        %803 = vmatpush1.bf16.msra.mxu0 0
        %804 = vmatprep.subr.bf16.mxu0 0
        %805 = vmatpush1.bf16.msra.mxu0 0
        %806 = vmatprep.subr.bf16.mxu0 0
        %807 = vmatpush1.bf16.msra.mxu0 0
        %808 = vmatprep.subr.bf16.mxu0 0
        %809 = vmatpush1.bf16.msra.mxu0 0
        %810 = vmatprep.subr.bf16.mxu0 0
        %811 = vmatpush1.bf16.msra.mxu0 0
        %812 = vmatprep.subr.bf16.mxu0 0
        %813 = vmatpush1.bf16.msra.mxu0 %v796
        %814 = vmatprep.subr.bf16.mxu0 0
        %815 = vmatpush2.bf16.msra.mxu0 0
        %816 = vmatprep.subr.bf16.mxu0 0
        %817 = vmatpush2.bf16.msra.mxu0 0
        %818 = vmatprep.subr.bf16.mxu0 0
        %819 = vmatpush2.bf16.msra.mxu0 0
        %820 = vmatprep.subr.bf16.mxu0 0
        %821 = vmatpush2.bf16.msra.mxu0 0
        %822 = vmatprep.subr.bf16.mxu0 0
        %823 = vmatpush2.bf16.msra.mxu0 0
        %824 = vmatprep.subr.bf16.mxu0 0
        %825 = vmatpush2.bf16.msra.mxu0 0
        %826 = vmatprep.subr.bf16.mxu0 0
        %827 = vmatpush2.bf16.msra.mxu0 0
        %828 = vmatprep.subr.bf16.mxu0 0
        %829 = vmatpush2.bf16.msra.mxu0 0
        %830 = vmatprep.mubr.bf16.mxu0 0
        %831 = vmatmul.mubr.bf16.gmra.mxu0 %v793
        %v832 = vpop.f32.mrf.mxu0
        %v833 = vadd.f32 0.0, %v832
        %v834 = vpop.f32.mrf.mxu0
        %v835 = vpop.f32.mrf.mxu0
        %v836 = vpop.f32.mrf.mxu0
        %837 = vdwg.mxu0
        %v838 = vrcp.pop %v788
        %v839 = vmul.f32 %v833, %v838
        %840 = vset.pattern.permute.xlu0 3
        %841 = vperm.xlu0 %840, %v614
        %v842 = vpop.permute.xlu0 %841
        %v844 = vlaneseq
        %v845 = vshrl.u32 %v844, 7
        %v846 = vsub.s32 3, %v845
        %v847 = vrot.slane %v615, %v846
        %v848 = vadd.f32 %v842, %v847
        %vm849 = vcmp.gt.f32.partialorder %v848, 0.0
        %v850 = vmul.f32 %v848, 0.2
        %v851 = vsel %vm849, %v848, %v850
        %v852 = vsel %vm629, %v851, -inf
        %853 = vmax.xlane.f32.xlu0 %v852
        %v854 = vpop.xlane.xlu0 %853
        %v855 = vsub.f32 %v851, %v854
        %v856 = vmul.f32 %v855, 1.442695
        %v857 = vpow.pop %v856
        %v858 = vmul.f32 %v857, %v612
        %v859 = vsel %vm629, %v858, 0.0
        %860 = vadd.xlane.f32.xlu0 %v859
        %v861 = vpop.xlane.xlu0 %860
        %v862 = vpack.c.bf16 %v858, %v858
        %863 = vrot.lane.b32.xlu0 %v716, 104
        %v864 = vpop.permute.xlu0 %863
        %v866 = vsel %vm629, %v862, 0
        %v869 = vsel %vm645, %v864, 0
        %871 = vmatprep.subr.bf16.mxu0 0
        %872 = vmatpush1.bf16.msra.mxu0 0
        %873 = vmatprep.subr.bf16.mxu0 0
        %874 = vmatpush1.bf16.msra.mxu0 0
        %875 = vmatprep.subr.bf16.mxu0 0
        %876 = vmatpush1.bf16.msra.mxu0 0
        %877 = vmatprep.subr.bf16.mxu0 0
        %878 = vmatpush1.bf16.msra.mxu0 0
        %879 = vmatprep.subr.bf16.mxu0 0
        %880 = vmatpush1.bf16.msra.mxu0 0
        %881 = vmatprep.subr.bf16.mxu0 0
        %882 = vmatpush1.bf16.msra.mxu0 0
        %883 = vmatprep.subr.bf16.mxu0 0
        %884 = vmatpush1.bf16.msra.mxu0 0
        %885 = vmatprep.subr.bf16.mxu0 0
        %886 = vmatpush1.bf16.msra.mxu0 %v869
        %887 = vmatprep.subr.bf16.mxu0 0
        %888 = vmatpush2.bf16.msra.mxu0 0
        %889 = vmatprep.subr.bf16.mxu0 0
        %890 = vmatpush2.bf16.msra.mxu0 0
        %891 = vmatprep.subr.bf16.mxu0 0
        %892 = vmatpush2.bf16.msra.mxu0 0
        %893 = vmatprep.subr.bf16.mxu0 0
        %894 = vmatpush2.bf16.msra.mxu0 0
        %895 = vmatprep.subr.bf16.mxu0 0
        %896 = vmatpush2.bf16.msra.mxu0 0
        %897 = vmatprep.subr.bf16.mxu0 0
        %898 = vmatpush2.bf16.msra.mxu0 0
        %899 = vmatprep.subr.bf16.mxu0 0
        %900 = vmatpush2.bf16.msra.mxu0 0
        %901 = vmatprep.subr.bf16.mxu0 0
        %902 = vmatpush2.bf16.msra.mxu0 0
        %903 = vmatprep.mubr.bf16.mxu0 0
        %904 = vmatmul.mubr.bf16.gmra.mxu0 %v866
        %v905 = vpop.f32.mrf.mxu0
        %v906 = vadd.f32 0.0, %v905
        %v907 = vpop.f32.mrf.mxu0
        %v908 = vpop.f32.mrf.mxu0
        %v909 = vpop.f32.mrf.mxu0
        %910 = vdwg.mxu0
        %v911 = vrcp.pop %v861
        %v912 = vmul.f32 %v906, %v911
        %914 = vrot.lane.b32.xlu0 %v766, 8
        %v915 = vpop.permute.xlu0 %914
        %918 = vrot.lane.b32.xlu0 %v839, 16
        %v919 = vpop.permute.xlu0 %918
        %922 = vrot.lane.b32.xlu0 %v912, 24
        %v923 = vpop.permute.xlu0 %922
        %v925 = vsel %vm629, %v690, %v915
        %vm926 = vcmask 130048
        %v927 = vsel %vm926, %v925, %v919
        %vm928 = vcmask 195584
        %v929 = vsel %vm928, %v927, %v923
        %v930 = vld [vmem:[%s4] sm:$0x1]
        %v932 = vlaneseq
        %v933 = vshrl.u32 %v932, 7
        %v934 = vsub.s32 0, %v933
        %v935 = vrot.slane %v930, %v934
        %v937 = vadd.f32 %v929, %v935
        %vm938 = vcmask 261120
        %939 = vst.msk [vmem:[%s265] sm:$0xff] %vm938, %v937
        %s940 = sand.u32 %s159, 1
        %s941 = scalar_lea.sflag [#allocation7], %s940
        %s942 = sand.u32 %s159, 1
        %s943 = smul.addr %s942, 8
        %s944 = scalar_lea.vmem [#allocation8], %s943
        // Predicated region
        $region49: #{tpu_custom_call.1} parent=39 // pred_check
          %p945 = pneg %p169
        $region50: #{tpu_custom_call.1} parent=39 // pred_check_branch
          %947 = sbr.rel (%p945) target = $region52
        $region51: #{tpu_custom_call.1} parent=39 // pred_region
          %s949 = ssub.s32 128, 128
          %950 = vsyncadd %s941, %s949
          %s951 = sadd.s32 %s25, %s24
          %s952 = smul.addr %s951, 128
          %s953 = scalar_lea.hbm %s5, %s952
          %s955 = sshll.u32 %s944, 4
          %s956 = int_to_ptr.vmem [resolvable:$true] %s955
          %958 = dma.vmem_to_hbm [thread:$0]  %s956, 128, %s953, %s941
        $region52: #{tpu_custom_call.1} parent=39 // pred_fallthru
          _
      $region40: #{tpu_custom_call.1} parent=5 // pred_fallthru
        _
      %p959 = scmp.le.s32.totalorder 2, %s15
      // Predicated region
      $region53: #{tpu_custom_call.1} parent=5 // pred_check
        %p960 = pneg %p959
      $region54: #{tpu_custom_call.1} parent=5 // pred_check_branch
        %962 = sbr.rel (%p960) target = $region56
      $region55: #{tpu_custom_call.1} parent=5 // pred_region
        %s963 = ssub.s32 %s15, 2
        // Predicated region
        $region57: #{tpu_custom_call.1} parent=55 // pred_check
          %p964 = pneg %p175
        $region58: #{tpu_custom_call.1} parent=55 // pred_check_branch
          %966 = sbr.rel (%p964) target = $region60
        $region59: #{tpu_custom_call.1} parent=55 // pred_region
          %s967 = sand.u32 %s160, 1
          %s968 = scalar_lea.sflag [#allocation7], %s967
          %s969 = sand.u32 %s160, 1
          %s970 = smul.addr %s969, 8
          %s971 = scalar_lea.vmem [#allocation8], %s970
          %972 = dma.done %s968, 128
        $region60: #{tpu_custom_call.1} parent=55 // pred_fallthru
          _
      $region56: #{tpu_custom_call.1} parent=5 // pred_fallthru
        _
    $region6: #{tpu_custom_call.1} parent=1 // loop_footer
      %s19 = sadd.s32 1, %s15
    $region7: #{tpu_custom_call.1} parent=1 // loop_footer_branch
      %14 = sbr.rel target = $region3
    $region8: #{tpu_custom_call.1} parent=1 // loop_exit
      _
    %973 = vsyncpa [#allocation6], 1
    %s974 = scalar_lea.sflag [#allocation6], 1
    %975 = vsyncpa %s974, 1
    %976 = vsyncpa [#allocation7], 1
    %s977 = scalar_lea.sflag [#allocation7], 1
    %978 = vsyncpa %s977, 1

</llo_original>
